<compile_context>
chip_gen: v7x
topology: tpu7x:2x2x1
jax: 0.10.0
libtpu: 0.0.40
codegen_flags: <defaults>
</compile_context>

<pallas_src>
import numpy as np
import jax
import jax.numpy as jnp
from jax import lax
from jax.experimental import pallas as pl
from jax.experimental.pallas import tpu as pltpu

_LANES = 128


def _log_sigmoid(x):
    # numerically stable log(sigmoid(x)) = min(x, 0) - log1p(exp(-|x|))
    return jnp.minimum(x, 0.0) - jnp.log1p(jnp.exp(-jnp.abs(x)))


def _make_kernel(*, inv_k, inv_b, nk, n_target, n_valid, unroll):
    def kernel(knots_ref, scores_ref, d_ref, out_ref):
        # ---- negative-sampling term: one fused lane-dense pass over scores ----
        s = scores_ref[...]                                        # (Sr, 128) f32
        r = lax.broadcasted_iota(jnp.int32, s.shape, 0)
        c = lax.broadcasted_iota(jnp.int32, s.shape, 1)
        flat = r * _LANES + c
        # Wrapper flattened transposed scores: first `n_target` flat entries are
        # the target scores, the rest (up to n_valid) are noise scores.
        is_tgt = flat < n_target
        is_valid = flat < n_valid
        ls = _log_sigmoid(jnp.where(is_tgt, s, -s))                # sign flip in-kernel
        w = jnp.where(is_tgt, 1.0, jnp.where(is_valid, inv_k, 0.0))
        ns = jnp.sum(w * ls, keepdims=True)                        # (1, 1)

        # ---- spline-derivative terms: whole D slab resident in VMEM ----
        def body(j, acc):
            kk = knots_ref[j]                                      # SMEM scalar read
            diff = d_ref[kk] - d_ref[kk - 1]                       # (rows, 128)
            ssq = jnp.sum(diff * diff, keepdims=True)              # (1, 1) reduce
            return acc + 0.5 * jnp.log(ssq)                        # log||.||_F == 0.5*log(ssq)

        spline = lax.fori_loop(0, nk, body, jnp.zeros((1, 1), jnp.float32),
                               unroll=unroll)

        out_ref[...] = (spline - ns) * inv_b                       # single tiny store

    return kernel


def negative_sampling_with_spline(scores, D, knot_locs):
    scores = jnp.asarray(scores, jnp.float32)
    D = jnp.asarray(D, jnp.float32)
    b, kp1 = scores.shape
    assert kp1 >= 2, "scores must have at least one noise column"
    k = kp1 - 1
    kt, m, n = D.shape
    mn = m * n

    # Static glue: the `for kk in knot_locs: if kk != 0:` loop of the reference.
    knots_np = np.asarray([int(kk) for kk in knot_locs if int(kk) != 0], dtype=np.int32)
    nk = int(knots_np.size)
    knots = jnp.asarray(knots_np if nk > 0 else np.zeros((1,), np.int32))

    # ---- layout plumbing only (no hot-path math in the wrapper) ----
    # Scores: transpose so the B target scores occupy the first B flat entries,
    # then pad to a lane-dense (Sr, 128) slab (dense vreg/EUP utilisation).
    total = b * kp1
    srows = max(1, pl.cdiv(total, _LANES))
    s_flat = jnp.transpose(scores).reshape(total)
    spad = srows * _LANES - total
    if spad:
        s_flat = jnp.pad(s_flat, (0, spad))
    s2 = s_flat.reshape(srows, _LANES)

    # D: lane-dense rows (Kt, rows, 128); zero lane-padding is harmless for the
    # Frobenius norm of row differences. Loaded once -> each row read once.
    drows = max(1, pl.cdiv(mn, _LANES))
    d_flat = D.reshape(kt, mn)
    dpad = drows * _LANES - mn
    if dpad:
        d_flat = jnp.pad(d_flat, ((0, 0), (0, dpad)))
    d3 = d_flat.reshape(kt, drows, _LANES)
    # TODO(synk): for very large Kt*M*N (approaching per-generation VMEM limits,
    # e.g. v7x 64 MiB physical), block the M*N axis with a grid and accumulate
    # per-knot ssq across blocks instead of loading the whole D slab.

    d_bytes = int(d3.size) * 4
    s_bytes = int(s2.size) * 4
    vmem_limit = int(min(64 << 20, max(32 << 20, 2 * (d_bytes + s_bytes) + (1 << 20))))

    cost = pl.CostEstimate(
        flops=3 * nk * drows * _LANES + 8 * srows * _LANES,
        transcendentals=2 * srows * _LANES + nk,
        bytes_accessed=d_bytes + s_bytes + 4 * nk + 4,
    )

    out = pl.pallas_call(
        _make_kernel(inv_k=1.0 / k, inv_b=1.0 / b, nk=nk,
                     n_target=b, n_valid=total, unroll=(nk <= 16)),
        out_shape=jax.ShapeDtypeStruct((1, 1), jnp.float32),
        in_specs=[
            pl.BlockSpec(memory_space=pltpu.MemorySpace.SMEM),   # nonzero knot indices
            pl.BlockSpec(memory_space=pltpu.MemorySpace.VMEM),   # lane-dense scores slab
            pl.BlockSpec(memory_space=pltpu.MemorySpace.VMEM),   # lane-dense D slab
        ],
        out_specs=pl.BlockSpec(memory_space=pltpu.MemorySpace.VMEM),
        compiler_params=pltpu.CompilerParams(vmem_limit_bytes=vmem_limit),
        cost_estimate=cost,
    )(knots, s2, d3)

    return out[0, 0]


def _reference(scores, D, knot_locs):
    ls = jax.nn.log_sigmoid
    k = scores.shape[1] - 1
    loss = -jnp.sum(ls(scores[:, 0]) + jnp.sum(ls(-scores[:, 1:]), axis=1) / k)
    for kk in knot_locs:
        if kk != 0:
            loss = loss + jnp.log(jnp.linalg.norm(D[kk] - D[kk - 1]))
    return loss / scores.shape[0]


if __name__ == "__main__":
    key = jax.random.PRNGKey(0)
    k1, k2 = jax.random.split(key)

    B, NW1 = 8, 6             # batch=8, num_noise_words=5 (scores has NW+1 cols)
    K, M, N = 6, 16, 32       # D: (num_knots_total, M, N)
    scores = jax.random.normal(k1, (B, NW1), dtype=jnp.float32)
    D = jax.random.normal(k2, (K, M, N), dtype=jnp.float32)
    knot_locs = [0, 2, 3, 5]

    loss = negative_sampling_with_spline(scores, D, knot_locs)
    loss = jax.block_until_ready(loss)

    expected = _reference(scores, D, knot_locs)
    assert np.allclose(np.asarray(loss), np.asarray(expected), rtol=1e-4, atol=1e-5), (
        loss, expected)
    print("KERNEL_OK")
</pallas_src>

<mosaic_0001>
module attributes {stable_mosaic.version = 11 : i64} {
  func.func @kernel(%arg0: memref<3xi32, #tpu.memory_space<smem>>, %arg1: memref<1x128xf32, #tpu.memory_space<vmem>>, %arg2: memref<6x4x128xf32, #tpu.memory_space<vmem>>, %arg3: memref<1x1xf32, #tpu.memory_space<vmem>>) attributes {dimension_semantics = [], scalar_prefetch = 0 : i64, scratch_operands = 0 : i64, tpu.core_type = #tpu.core_type<tc>} {
    %c0 = arith.constant 0 : index
    %c0_0 = arith.constant 0 : index
    %0 = vector.load %arg1[%c0, %c0_0] : memref<1x128xf32, #tpu.memory_space<vmem>>, vector<1x128xf32>
    %1 = tpu.iota {dimensions = array<i32: 0>} : vector<1x128xi32>
    %2 = tpu.iota {dimensions = array<i32: 1>} : vector<1x128xi32>
    %c128_i32 = arith.constant 128 : i32
    %3 = vector.broadcast %c128_i32 : i32 to vector<1x128xi32>
    %4 = arith.muli %1, %3 : vector<1x128xi32>
    %5 = arith.addi %4, %2 : vector<1x128xi32>
    %c8_i32 = arith.constant 8 : i32
    %6 = vector.broadcast %c8_i32 : i32 to vector<1x128xi32>
    %7 = arith.cmpi slt, %5, %6 : vector<1x128xi32>
    %c48_i32 = arith.constant 48 : i32
    %8 = vector.broadcast %c48_i32 : i32 to vector<1x128xi32>
    %9 = arith.cmpi slt, %5, %8 : vector<1x128xi32>
    %cst = arith.constant 0.000000e+00 : f32
    %10 = vector.broadcast %cst : f32 to vector<1x128xf32>
    %11 = arith.subf %10, %0 : vector<1x128xf32>
    %12 = arith.select %7, %0, %11 : vector<1x128xi1>, vector<1x128xf32>
    %cst_1 = arith.constant 0.000000e+00 : f32
    %13 = vector.broadcast %cst_1 : f32 to vector<1x128xf32>
    %14 = arith.minimumf %12, %13 : vector<1x128xf32>
    %15 = math.absf %12 : vector<1x128xf32>
    %cst_2 = arith.constant 0.000000e+00 : f32
    %16 = vector.broadcast %cst_2 : f32 to vector<1x128xf32>
    %17 = arith.subf %16, %15 : vector<1x128xf32>
    %18 = math.exp %17 : vector<1x128xf32>
    %19 = math.log1p %18 : vector<1x128xf32>
    %20 = arith.subf %14, %19 : vector<1x128xf32>
    %cst_3 = arith.constant 2.000000e-01 : f32
    %cst_4 = arith.constant 0.000000e+00 : f32
    %21 = vector.broadcast %cst_3 : f32 to vector<1x128xf32>
    %22 = vector.broadcast %cst_4 : f32 to vector<1x128xf32>
    %23 = arith.select %9, %21, %22 : vector<1x128xi1>, vector<1x128xf32>
    %cst_5 = arith.constant 1.000000e+00 : f32
    %24 = vector.broadcast %cst_5 : f32 to vector<1x128xf32>
    %25 = arith.select %7, %24, %23 : vector<1x128xi1>, vector<1x128xf32>
    %26 = arith.mulf %25, %20 : vector<1x128xf32>
    %27 = vector.shape_cast %26 : vector<1x128xf32> to vector<1x1x128xf32>
    %cst_6 = arith.constant dense<0.000000e+00> : vector<1xf32>
    %28 = vector.multi_reduction <add>, %27, %cst_6 [1, 2] : vector<1x1x128xf32> to vector<1xf32>
    %29 = vector.shape_cast %28 : vector<1xf32> to vector<1x1x1xf32>
    %30 = vector.extract %29[0, 0, 0] : f32 from vector<1x1x1xf32>
    %31 = vector.broadcast %30 : f32 to vector<1x1xf32>
    %cst_7 = arith.constant 0.000000e+00 : f32
    %32 = vector.broadcast %cst_7 : f32 to vector<1x1xf32>
    %c0_i32 = arith.constant 0 : i32
    %33 = arith.index_cast %c0_i32 : i32 to index
    %34 = memref.load %arg0[%33] : memref<3xi32, #tpu.memory_space<smem>>
    %35 = arith.index_cast %34 : i32 to index
    %c0_8 = arith.constant 0 : index
    %c0_9 = arith.constant 0 : index
    %36 = vector.load %arg2[%35, %c0_8, %c0_9] : memref<6x4x128xf32, #tpu.memory_space<vmem>>, vector<1x4x128xf32>
    %37 = vector.shape_cast %36 : vector<1x4x128xf32> to vector<4x128xf32>
    %c1_i32 = arith.constant 1 : i32
    %38 = arith.subi %34, %c1_i32 : i32
    %39 = arith.index_cast %38 : i32 to index
    %c0_10 = arith.constant 0 : index
    %c0_11 = arith.constant 0 : index
    %40 = vector.load %arg2[%39, %c0_10, %c0_11] : memref<6x4x128xf32, #tpu.memory_space<vmem>>, vector<1x4x128xf32>
    %41 = vector.shape_cast %40 : vector<1x4x128xf32> to vector<4x128xf32>
    %42 = arith.subf %37, %41 : vector<4x128xf32>
    %43 = arith.mulf %42, %42 : vector<4x128xf32>
    %44 = vector.shape_cast %43 : vector<4x128xf32> to vector<1x4x128xf32>
    %cst_12 = arith.constant dense<0.000000e+00> : vector<1xf32>
    %45 = vector.multi_reduction <add>, %44, %cst_12 [1, 2] : vector<1x4x128xf32> to vector<1xf32>
    %46 = vector.shape_cast %45 : vector<1xf32> to vector<1x1x1xf32>
    %47 = vector.extract %46[0, 0, 0] : f32 from vector<1x1x1xf32>
    %48 = vector.broadcast %47 : f32 to vector<1x1xf32>
    %49 = math.log %48 : vector<1x1xf32>
    %cst_13 = arith.constant 5.000000e-01 : f32
    %50 = vector.broadcast %cst_13 : f32 to vector<1x1xf32>
    %51 = arith.mulf %50, %49 : vector<1x1xf32>
    %52 = arith.addf %32, %51 : vector<1x1xf32>
    %c1_i32_14 = arith.constant 1 : i32
    %53 = arith.index_cast %c1_i32_14 : i32 to index
    %54 = memref.load %arg0[%53] : memref<3xi32, #tpu.memory_space<smem>>
    %55 = arith.index_cast %54 : i32 to index
    %c0_15 = arith.constant 0 : index
    %c0_16 = arith.constant 0 : index
    %56 = vector.load %arg2[%55, %c0_15, %c0_16] : memref<6x4x128xf32, #tpu.memory_space<vmem>>, vector<1x4x128xf32>
    %57 = vector.shape_cast %56 : vector<1x4x128xf32> to vector<4x128xf32>
    %c1_i32_17 = arith.constant 1 : i32
    %58 = arith.subi %54, %c1_i32_17 : i32
    %59 = arith.index_cast %58 : i32 to index
    %c0_18 = arith.constant 0 : index
    %c0_19 = arith.constant 0 : index
    %60 = vector.load %arg2[%59, %c0_18, %c0_19] : memref<6x4x128xf32, #tpu.memory_space<vmem>>, vector<1x4x128xf32>
    %61 = vector.shape_cast %60 : vector<1x4x128xf32> to vector<4x128xf32>
    %62 = arith.subf %57, %61 : vector<4x128xf32>
    %63 = arith.mulf %62, %62 : vector<4x128xf32>
    %64 = vector.shape_cast %63 : vector<4x128xf32> to vector<1x4x128xf32>
    %cst_20 = arith.constant dense<0.000000e+00> : vector<1xf32>
    %65 = vector.multi_reduction <add>, %64, %cst_20 [1, 2] : vector<1x4x128xf32> to vector<1xf32>
    %66 = vector.shape_cast %65 : vector<1xf32> to vector<1x1x1xf32>
    %67 = vector.extract %66[0, 0, 0] : f32 from vector<1x1x1xf32>
    %68 = vector.broadcast %67 : f32 to vector<1x1xf32>
    %69 = math.log %68 : vector<1x1xf32>
    %cst_21 = arith.constant 5.000000e-01 : f32
    %70 = vector.broadcast %cst_21 : f32 to vector<1x1xf32>
    %71 = arith.mulf %70, %69 : vector<1x1xf32>
    %72 = arith.addf %52, %71 : vector<1x1xf32>
    %c2_i32 = arith.constant 2 : i32
    %73 = arith.index_cast %c2_i32 : i32 to index
    %74 = memref.load %arg0[%73] : memref<3xi32, #tpu.memory_space<smem>>
    %75 = arith.index_cast %74 : i32 to index
    %c0_22 = arith.constant 0 : index
    %c0_23 = arith.constant 0 : index
    %76 = vector.load %arg2[%75, %c0_22, %c0_23] : memref<6x4x128xf32, #tpu.memory_space<vmem>>, vector<1x4x128xf32>
    %77 = vector.shape_cast %76 : vector<1x4x128xf32> to vector<4x128xf32>
    %c1_i32_24 = arith.constant 1 : i32
    %78 = arith.subi %74, %c1_i32_24 : i32
    %79 = arith.index_cast %78 : i32 to index
    %c0_25 = arith.constant 0 : index
    %c0_26 = arith.constant 0 : index
    %80 = vector.load %arg2[%79, %c0_25, %c0_26] : memref<6x4x128xf32, #tpu.memory_space<vmem>>, vector<1x4x128xf32>
    %81 = vector.shape_cast %80 : vector<1x4x128xf32> to vector<4x128xf32>
    %82 = arith.subf %77, %81 : vector<4x128xf32>
    %83 = arith.mulf %82, %82 : vector<4x128xf32>
    %84 = vector.shape_cast %83 : vector<4x128xf32> to vector<1x4x128xf32>
    %cst_27 = arith.constant dense<0.000000e+00> : vector<1xf32>
    %85 = vector.multi_reduction <add>, %84, %cst_27 [1, 2] : vector<1x4x128xf32> to vector<1xf32>
    %86 = vector.shape_cast %85 : vector<1xf32> to vector<1x1x1xf32>
    %87 = vector.extract %86[0, 0, 0] : f32 from vector<1x1x1xf32>
    %88 = vector.broadcast %87 : f32 to vector<1x1xf32>
    %89 = math.log %88 : vector<1x1xf32>
    %cst_28 = arith.constant 5.000000e-01 : f32
    %90 = vector.broadcast %cst_28 : f32 to vector<1x1xf32>
    %91 = arith.mulf %90, %89 : vector<1x1xf32>
    %92 = arith.addf %72, %91 : vector<1x1xf32>
    %c3_i32 = arith.constant 3 : i32
    %93 = arith.subf %92, %31 : vector<1x1xf32>
    %cst_29 = arith.constant 1.250000e-01 : f32
    %94 = vector.broadcast %cst_29 : f32 to vector<1x1xf32>
    %95 = arith.mulf %93, %94 : vector<1x1xf32>
    %c0_30 = arith.constant 0 : index
    %c0_31 = arith.constant 0 : index
    %96 = vector.load %arg3[%c0_30, %c0_31] : memref<1x1xf32, #tpu.memory_space<vmem>>, vector<1x1xf32>
    tpu.vector_store %arg3[%c0_30, %c0_31], %95 {strides = array<i32>} : memref<1x1xf32, #tpu.memory_space<vmem>>, vector<1x1xf32>,
    return
  }
}

</mosaic_0001>

<llo_original>
// kernel: tpu_custom_call.1
$region0: #{tpu_custom_call.1}
  #allocation0 [shape = 'u32[]', space=smem, size = 0x4, offset = 0x4, fixed_abs, tag = 'smem constant byte address 0x4 - core index']
  #allocation1 [shape = 'u32[144,128]{1,0:T(1,128)}', space=vmem, size = 0x12000, scoped, tag = 'internal scratch']
  %s0 = inlined_call_operand.hbm [shape: s32[3], index: 0, kind: input, shape index: {}]
  %s1 = inlined_call_operand.vmem [shape: f32[1,128], index: 1, kind: input, shape index: {}]
  %s2 = inlined_call_operand.hbm [shape: f32[6,4,128], index: 2, kind: input, shape index: {}]
  %s3 = inlined_call_operand.hbm [shape: f32[1,1], index: 3, kind: output, shape index: {}]
  %s4 = sld [smem:[#allocation0]]
  $region30: #{tpu_custom_call.1} parent=0
    _
  %s6 = ssub.s32 1, %s4
  %s7 = scalar_select 0, %s6, %s4
  $region1: #{tpu_custom_call.1} parent=0
    #allocation2 [shape = 'u8[512]{0}', space=smem, size = 0x200, scoped, tag = 'input window, operand 0, single buffered']
    #allocation3 [shape = 's32[1]{0}', space=sflag, size = 0x4, scoped, tag = 'scoped memory for tpu_custom_call.1']
    #allocation4 [shape = 's32[1]{0}', space=sflag, size = 0x4, scoped, tag = 'scoped memory for tpu_custom_call.1']
    #allocation5 [shape = 's32[1]{0}', space=sflag, size = 0x4, scoped, tag = 'scoped memory for tpu_custom_call.1']
    #allocation6 [shape = 'u8[12288]{0}', space=vmem, size = 0x3000, scoped, tag = 'input window, operand 2, single buffered']
    #allocation7 [shape = 'u8[512]{0}', space=vmem, size = 0x400, scoped, tag = 'output window, operand 0, single buffered']
    %8 = vsyncpa [#allocation5], 0
    %9 = vsyncpa [#allocation3], 0
    %10 = vsyncpa [#allocation4], 0
    // Predicated region
    $region2: #{tpu_custom_call.1} parent=1 // pred_check
      _
    $region3: #{tpu_custom_call.1} parent=1 // pred_check_branch
      %12 = sbr.rel (0) target = $region5
    $region4: #{tpu_custom_call.1} parent=1 // pred_region
      %s14 = ssub.s32 16, 16
      %15 = vsyncadd [#allocation5], %s14
      %18 = dma.hbm_to_smem %s0, 16, [#allocation2], [#allocation5]
    $region5: #{tpu_custom_call.1} parent=1 // pred_fallthru
      _
    // Predicated region
    $region6: #{tpu_custom_call.1} parent=1 // pred_check
      _
    $region7: #{tpu_custom_call.1} parent=1 // pred_check_branch
      %20 = sbr.rel (0) target = $region9
    $region8: #{tpu_custom_call.1} parent=1 // pred_region
      _
    $region9: #{tpu_custom_call.1} parent=1 // pred_fallthru
      _
    // Predicated region
    $region10: #{tpu_custom_call.1} parent=1 // pred_check
      _
    $region11: #{tpu_custom_call.1} parent=1 // pred_check_branch
      %22 = sbr.rel (0) target = $region13
    $region12: #{tpu_custom_call.1} parent=1 // pred_region
      %s24 = ssub.s32 384, 384
      %25 = vsyncadd [#allocation3], %s24
      %s26 = sshll.u32 [#allocation6], 4
      %s27 = int_to_ptr.vmem [resolvable:$true] %s26
      %32 = dma.hbm_to_vmem [thread:$0]  %s2, 384, %s27, [#allocation3], 64, 64, 4
    $region13: #{tpu_custom_call.1} parent=1 // pred_fallthru
      _
    // Predicated region
    $region14: #{tpu_custom_call.1} parent=1 // pred_check
      _
    $region15: #{tpu_custom_call.1} parent=1 // pred_check_branch
      %34 = sbr.rel (0) target = $region17
    $region16: #{tpu_custom_call.1} parent=1 // pred_region
      %35 = dma.done [#allocation5], 16
    $region17: #{tpu_custom_call.1} parent=1 // pred_fallthru
      _
    // Predicated region
    $region18: #{tpu_custom_call.1} parent=1 // pred_check
      _
    $region19: #{tpu_custom_call.1} parent=1 // pred_check_branch
      %37 = sbr.rel (0) target = $region21
    $region20: #{tpu_custom_call.1} parent=1 // pred_region
      %38 = dma.done [#allocation3], 384
    $region21: #{tpu_custom_call.1} parent=1 // pred_fallthru
      _
    %39 = sfence
    %v40 = vld [vmem:[%s1] sm:$0x1]
    %v41 = vlaneseq
    %v42 = vshrl.u32 %v41, 7
    %v43 = vlaneseq
    %v44 = vand.u32 %v43, 127
    %v45 = vmul.u32 %v42, 128
    %v46 = vadd.s32 %v45, %v44
    %vm47 = vcmp.lt.s32.totalorder %v46, 8
    %vm48 = vcmp.lt.s32.totalorder %v46, 48
    %v49 = vsub.f32 0.0, %v40
    %v50 = vsel %vm47, %v40, %v49
    %v51 = vmin.f32 %v50, 0.0
    %v52 = vand.u32 2147483647, %v50
    %v53 = vsub.f32 0.0, %v52
    %v54 = vmul.f32 %v53, 1.442695
    %v55 = vpow.pop %v54
    %v56 = vadd.f32 %v55, 1.0
    %v57 = vlog2.pop %v56
    %v58 = vmul.f32 %v57, 0.6931472
    %v59 = vmul.f32 -0.5, %v55
    %v60 = vadd.f32 %v59, 1.0
    %v61 = vmul.f32 %v60, %v55
    %v62 = vand.u32 2147483647, %v55
    %vm63 = vcmp.lt.f32.partialorder %v62, 0.0004427343
    %v64 = vsel %vm63, %v61, %v58
    %v65 = vsub.f32 %v51, %v64
    %v66 = vsel %vm48, 0.2, 0.0
    %v67 = vsel %vm47, 1.0, %v66
    %v68 = vmul.f32 %v67, %v65
    %vm69 = vcmask 1040384
    %v70 = vsel %vm69, %v68, 0.0
    %71 = vadd.xlane.f32.xlu0 %v70
    %v72 = vpop.xlane.xlu0 %71
    %v73 = vrot.slane %v72, 4
    %v74 = vadd.f32 %v72, %v73
    %v75 = vrot.slane %v74, 2
    %v76 = vadd.f32 %v74, %v75
    %v77 = vrot.slane %v76, 1
    %v78 = vadd.f32 %v76, %v77
    %s79 = vtos %v78
    %v80 = vstv %s79
    %s81 = sld [smem:[#allocation2]]
    %s82 = smul.u32 %s81, 4
    %s83 = scalar_lea.vmem [#allocation6], %s82
    %v84 = vld [vmem:[%s83] sm:$0xf]
    %s85 = ssub.s32 %s81, 1
    %s86 = smul.u32 %s85, 4
    %s87 = scalar_lea.vmem [#allocation6], %s86
    %v88 = vld [vmem:[%s87] sm:$0xf]
    %v89 = vsub.f32 %v84, %v88
    %v90 = vmul.f32 %v89, %v89
    %vm91 = vcmask 1043456
    %v92 = vsel %vm91, %v90, 0.0
    %93 = vadd.xlane.f32.xlu0 %v92
    %v94 = vpop.xlane.xlu0 %93
    %v95 = vrot.slane %v94, 4
    %v96 = vadd.f32 %v94, %v95
    %v97 = vrot.slane %v96, 2
    %v98 = vadd.f32 %v96, %v97
    %v99 = vrot.slane %v98, 1
    %v100 = vadd.f32 %v98, %v99
    %s101 = vtos %v100
    %v102 = vstv %s101
    %v103 = vlog2.pop %v102
    %v104 = vmul.f32 %v103, 0.6931472
    %v105 = vmul.f32 %v104, 0.5
    %v106 = vadd.f32 %v105, 0.0
    %s107 = sld [smem:[#allocation2 + $0x1]]
    %s108 = smul.u32 %s107, 4
    %s109 = scalar_lea.vmem [#allocation6], %s108
    %v110 = vld [vmem:[%s109] sm:$0xf]
    %s111 = ssub.s32 %s107, 1
    %s112 = smul.u32 %s111, 4
    %s113 = scalar_lea.vmem [#allocation6], %s112
    %v114 = vld [vmem:[%s113] sm:$0xf]
    %v115 = vsub.f32 %v110, %v114
    %v116 = vmul.f32 %v115, %v115
    %v117 = vsel %vm91, %v116, 0.0
    %118 = vadd.xlane.f32.xlu0 %v117
    %v119 = vpop.xlane.xlu0 %118
    %v120 = vrot.slane %v119, 4
    %v121 = vadd.f32 %v119, %v120
    %v122 = vrot.slane %v121, 2
    %v123 = vadd.f32 %v121, %v122
    %v124 = vrot.slane %v123, 1
    %v125 = vadd.f32 %v123, %v124
    %s126 = vtos %v125
    %v127 = vstv %s126
    %v128 = vlog2.pop %v127
    %v129 = vmul.f32 %v128, 0.6931472
    %v130 = vmul.f32 %v129, 0.5
    %v131 = vadd.f32 %v106, %v130
    %s132 = sld [smem:[#allocation2 + $0x2]]
    %s133 = smul.u32 %s132, 4
    %s134 = scalar_lea.vmem [#allocation6], %s133
    %v135 = vld [vmem:[%s134] sm:$0xf]
    %s136 = ssub.s32 %s132, 1
    %s137 = smul.u32 %s136, 4
    %s138 = scalar_lea.vmem [#allocation6], %s137
    %v139 = vld [vmem:[%s138] sm:$0xf]
    %v140 = vsub.f32 %v135, %v139
    %v141 = vmul.f32 %v140, %v140
    %v142 = vsel %vm91, %v141, 0.0
    %143 = vadd.xlane.f32.xlu0 %v142
    %v144 = vpop.xlane.xlu0 %143
    %v145 = vrot.slane %v144, 4
    %v146 = vadd.f32 %v144, %v145
    %v147 = vrot.slane %v146, 2
    %v148 = vadd.f32 %v146, %v147
    %v149 = vrot.slane %v148, 1
    %v150 = vadd.f32 %v148, %v149
    %s151 = vtos %v150
    %v152 = vstv %s151
    %v153 = vlog2.pop %v152
    %v154 = vmul.f32 %v153, 0.6931472
    %v155 = vmul.f32 %v154, 0.5
    %v156 = vadd.f32 %v131, %v155
    %v157 = vsub.f32 %v156, %v80
    %v158 = vmul.f32 %v157, 0.125
    %vm159 = vcmask 0
    %160 = vst.msk [vmem:[#allocation7] sm:$0x1] %vm159, %v158
    // Predicated region
    $region22: #{tpu_custom_call.1} parent=1 // pred_check
      _
    $region23: #{tpu_custom_call.1} parent=1 // pred_check_branch
      %162 = sbr.rel (0) target = $region25
    $region24: #{tpu_custom_call.1} parent=1 // pred_region
      %s164 = ssub.s32 16, 16
      %165 = vsyncadd [#allocation4], %s164
      %s167 = sshll.u32 [#allocation7], 4
      %s168 = int_to_ptr.vmem [resolvable:$true] %s167
      %170 = dma.vmem_to_hbm [thread:$0]  %s168, 16, %s3, [#allocation4]
    $region25: #{tpu_custom_call.1} parent=1 // pred_fallthru
      _
    // Predicated region
    $region26: #{tpu_custom_call.1} parent=1 // pred_check
      _
    $region27: #{tpu_custom_call.1} parent=1 // pred_check_branch
      %172 = sbr.rel (0) target = $region29
    $region28: #{tpu_custom_call.1} parent=1 // pred_region
      %173 = dma.done [#allocation4], 16
    $region29: #{tpu_custom_call.1} parent=1 // pred_fallthru
      _
    %174 = vsyncpa [#allocation3], 1
    %175 = vsyncpa [#allocation4], 1
    %176 = vsyncpa [#allocation5], 1

</llo_original>
